<compile_context>
chip_gen: v7x
topology: tpu7x:2x2x1
jax: 0.10.0
libtpu: 0.0.40
codegen_flags: <defaults>
</compile_context>

<pallas_src>
import functools
import math

import jax
import jax.numpy as jnp
from jax.experimental import pallas as pl
from jax.experimental.pallas import tpu as pltpu


# ----------------------------------------------------------------------------
# Pallas kernel: channel-block gather expressed purely in the input index_map
# ----------------------------------------------------------------------------
def _gather_copy_kernel(idx_ref, x_ref, o_ref):
    # idx_ref (SMEM, scalar-prefetched) is consumed by the index_maps only;
    # the body is a pure VMEM tile copy (the gather happens in the input DMA).
    del idx_ref
    o_ref[...] = x_ref[...]


def _sublane_quantum(itemsize):
    # f32 -> 8, bf16/f16 -> 16, int8/fp8 -> 32 sublanes per packed vreg row.
    return max(8, 32 // max(1, itemsize))


def _spatial_factor(S):
    """Factor spatial size S into (rows, lanes) with lane-dense last dim."""
    if S % 128 == 0:
        return S // 128, 128
    # No multiple-of-128 divisor exists (128 | d and d | S would imply 128 | S)
    # -> keep the whole spatial extent as the last axis (full-dim block), so
    # only the tail vreg per row is a masked store.
    return 1, S


_PER_BLOCK_CAP = 2 << 20  # ~2 MiB/block: near the copy roofline on v5e/v6e/v7x
                          # and safely inside v5e's 16 MiB scoped-VMEM default
                          # with double-buffered input + output.


@functools.partial(jax.jit, static_argnames=("channel_block",))
def permute_channels_pallas(x, block_idx, channel_block=1):
    """out[:, i*cb:(i+1)*cb] = x[:, block_idx[i]*cb:(block_idx[i]+1)*cb] (NCHW).

    `block_idx` is an int32 vector of length C // channel_block holding input
    channel-BLOCK indices (scalar-prefetched into SMEM, consumed only by the
    BlockSpec index_maps).
    """
    B, C, H, W = x.shape
    cb = channel_block
    assert C % cb == 0
    n_cb = C // cb

    S = H * W
    itemsize = jnp.dtype(x.dtype).itemsize
    q = _sublane_quantum(itemsize)

    R, L = _spatial_factor(S)
    x4 = x.reshape(B, C, R, L)  # free reshape of contiguous trailing dims

    # --- spatial tiling (legal tiles: multiple of quantum/128 OR full dim) ---
    if R > 1:
        max_rows = max(1, _PER_BLOCK_CAP // (B * cb * L * itemsize))
        r_tile = (max_rows // q) * q
        if r_tile == 0:
            r_tile = q
        r_tile = min(R, r_tile)          # == R (full) or a multiple of q
        l_tile = L                       # full lane dim (128)
    else:
        r_tile = 1                       # == R (full)
        max_lanes = max(1, _PER_BLOCK_CAP // (B * cb * itemsize))
        l_tile = (max_lanes // 128) * 128
        if l_tile == 0:
            l_tile = 128
        l_tile = min(L, l_tile)          # == L (full) or a multiple of 128
    n_r = pl.cdiv(R, r_tile)             # ragged tail handled by Pallas masks
    n_l = pl.cdiv(L, l_tile)

    block_shape = (B, cb, r_tile, l_tile)
    block_bytes = B * cb * r_tile * l_tile * itemsize

    # --- grid ordering: put the larger axis first for megacore (v7x) balance ---
    n_sp = n_r * n_l
    if n_sp >= n_cb:
        grid = (n_r, n_l, n_cb)
        in_map = lambda r, l, c, idx_ref: (0, idx_ref[c], r, l)
        out_map = lambda r, l, c, idx_ref: (0, c, r, l)
    else:
        grid = (n_cb, n_r, n_l)
        in_map = lambda c, r, l, idx_ref: (0, idx_ref[c], r, l)
        out_map = lambda c, r, l, idx_ref: (0, c, r, l)

    # Only raise the scoped-VMEM limit if the (rare) minimum-legal block would
    # overflow the conservative default budget (in + out, double-buffered).
    vmem_limit = None
    if 4 * block_bytes > 12 * (1 << 20):
        vmem_limit = min(64 * (1 << 20), 4 * block_bytes + (8 << 20))

    # TODO(synk): for the latency-bound regime (tiny per-channel spatial data,
    # channel_block == 1) deeper buffering (pipeline_mode=pl.Buffered(3)) or a
    # manual HBM->HBM DMA loop would hide per-step overhead further.

    out = pl.pallas_call(
        _gather_copy_kernel,
        out_shape=jax.ShapeDtypeStruct((B, C, R, L), x.dtype),
        grid_spec=pltpu.PrefetchScalarGridSpec(
            num_scalar_prefetch=1,
            grid=grid,
            in_specs=[pl.BlockSpec(block_shape, in_map)],
            out_specs=pl.BlockSpec(block_shape, out_map),
        ),
        compiler_params=pltpu.CompilerParams(
            dimension_semantics=("parallel",) * len(grid),
            vmem_limit_bytes=vmem_limit,
        ),
        cost_estimate=pl.CostEstimate(
            flops=0,
            transcendentals=0,
            bytes_accessed=2 * x.size * itemsize,   # read once + write once
        ),
    )(block_idx.astype(jnp.int32), x4)

    return out.reshape(B, C, H, W)


def _swap_channel_block(C, shift, B, S, itemsize, cap_bytes=_PER_BLOCK_CAP):
    """Largest channel block cb (divisor of gcd(shift, C)) fitting the VMEM cap.

    With cb | gcd(shift, C), every output channel block of size cb maps to one
    contiguous, cb-aligned input channel block, so the swap is a block gather.
    """
    g = math.gcd(shift % C, C) or C
    R, L = _spatial_factor(S)
    q = _sublane_quantum(itemsize)
    min_sp = (min(R, q) * L) if R > 1 else min(L, 128)  # smallest legal tile
    max_cb = max(1, cap_bytes // max(1, B * min_sp * itemsize))
    cb = 1
    for d in range(1, g + 1):
        if g % d == 0 and d <= max_cb:
            cb = d
    return cb


# ----------------------------------------------------------------------------
# Permute2d module (JAX port of the PyTorch reference)
# ----------------------------------------------------------------------------
class Permute2d:
    """Permutation of features along the channel dimension (NCHW)."""

    def __init__(self, num_channels, mode="shuffle", key=None):
        self.mode = mode
        self.num_channels = num_channels
        if mode == "shuffle":
            # TODO(synk): permutation drawn with jax.random; consistent within
            # JAX but not bit-identical to a given torch.randperm seed.
            if key is None:
                key = jax.random.PRNGKey(0)
            perm = jax.random.permutation(key, num_channels).astype(jnp.int32)
            self.perm = perm
            self.inv_perm = jnp.argsort(perm).astype(jnp.int32)
        elif mode == "swap":
            pass  # swap indices depend only on C; built on the fly in __call__
        else:
            raise NotImplementedError("The mode " + mode + " is not implemented.")

    def __call__(self, z, reverse=False):
        assert z.ndim == 4
        B, C, H, W = z.shape
        assert C == self.num_channels

        if self.mode == "shuffle":
            idx = self.inv_perm if reverse else self.perm
            return permute_channels_pallas(z, idx, channel_block=1)

        # swap: circular channel shift -> contiguous channel-block fast path.
        shift = ((C + 1) // 2) if reverse else (C // 2)
        cb = _swap_channel_block(C, shift, B, H * W, jnp.dtype(z.dtype).itemsize)
        n_cb = C // cb
        block_idx = jnp.asarray(
            [((i * cb + shift) % C) // cb for i in range(n_cb)], dtype=jnp.int32)
        return permute_channels_pallas(z, block_idx, channel_block=cb)


# ----------------------------------------------------------------------------
# Demo / self-check
# ----------------------------------------------------------------------------
if __name__ == "__main__":
    B, C, H, W = 2, 8, 16, 16

    key = jax.random.PRNGKey(0)
    kx, kp, kx2 = jax.random.split(key, 3)
    x = jax.random.normal(kx, (B, C, H, W), dtype=jnp.float32)

    # --- shuffle mode (per-channel gather path, lane-dense S % 128 == 0) ---
    mod = Permute2d(C, mode="shuffle", key=kp)
    z = jax.block_until_ready(mod(x))
    z_ref = jnp.take(x, mod.perm, axis=1)
    assert z.shape == x.shape and z.dtype == x.dtype
    assert jnp.array_equal(z, z_ref)

    x_back = jax.block_until_ready(mod(z, reverse=True))
    assert jnp.array_equal(x_back, x)

    # --- swap mode (channel-block fast path: 2 contiguous half copies) ---
    mod_swap = Permute2d(C, mode="swap")
    zs = jax.block_until_ready(mod_swap(x))
    zs_ref = jnp.concatenate([x[:, C // 2:], x[:, :C // 2]], axis=1)
    assert jnp.array_equal(zs, zs_ref)

    xs_back = jax.block_until_ready(mod_swap(zs, reverse=True))
    assert jnp.array_equal(xs_back, x)

    # --- odd channels + non-multiple-of-128 spatial: exercises the generic
    #     per-channel gather path and the flattened-spatial fallback ---
    B2, C2, H2, W2 = 2, 5, 5, 7
    x2 = jax.random.normal(kx2, (B2, C2, H2, W2), dtype=jnp.float32)
    mod_swap2 = Permute2d(C2, mode="swap")
    zs2 = jax.block_until_ready(mod_swap2(x2))
    zs2_ref = jnp.concatenate([x2[:, C2 // 2:], x2[:, :C2 // 2]], axis=1)
    assert jnp.array_equal(zs2, zs2_ref)
    xs2_back = jax.block_until_ready(mod_swap2(zs2, reverse=True))
    assert jnp.array_equal(xs2_back, x2)

    print("KERNEL_OK")
</pallas_src>

<mosaic_0001>
module attributes {stable_mosaic.version = 11 : i64} {
  func.func @_gather_copy_kernel(%arg0: i32, %arg1: i32, %arg2: i32, %arg3: memref<8xi32, #tpu.memory_space<smem>>, %arg4: memref<2x1x2x128xf32, #tpu.memory_space<vmem>>, %arg5: memref<2x1x2x128xf32, #tpu.memory_space<vmem>>) attributes {dimension_semantics = [#tpu.dimension_semantics<parallel>, #tpu.dimension_semantics<parallel>, #tpu.dimension_semantics<parallel>], iteration_bounds = array<i64: 8, 1, 1>, scalar_prefetch = 1 : i64, scratch_operands = 0 : i64, tpu.core_type = #tpu.core_type<tc>, window_params = [{transform_indices = @transform_0, window_bounds = array<i64: 2, 1, 2, 128>}, {transform_indices = @transform_1, window_bounds = array<i64: 2, 1, 2, 128>}]} {
    %c0 = arith.constant 0 : index
    %c0_0 = arith.constant 0 : index
    %c0_1 = arith.constant 0 : index
    %c0_2 = arith.constant 0 : index
    %0 = vector.load %arg4[%c0, %c0_0, %c0_1, %c0_2] : memref<2x1x2x128xf32, #tpu.memory_space<vmem>>, vector<2x1x2x128xf32>
    %c0_3 = arith.constant 0 : index
    %c0_4 = arith.constant 0 : index
    %c0_5 = arith.constant 0 : index
    %c0_6 = arith.constant 0 : index
    %1 = vector.load %arg5[%c0_3, %c0_4, %c0_5, %c0_6] : memref<2x1x2x128xf32, #tpu.memory_space<vmem>>, vector<2x1x2x128xf32>
    tpu.vector_store %arg5[%c0_3, %c0_4, %c0_5, %c0_6], %0 {strides = array<i32>} : memref<2x1x2x128xf32, #tpu.memory_space<vmem>>, vector<2x1x2x128xf32>,
    return
  }
  func.func @transform_0(%arg0: i32, %arg1: i32, %arg2: i32, %arg3: memref<8xi32, #tpu.memory_space<smem>>) -> (i32, i32, i32, i32) {
    %0 = arith.index_cast %arg0 : i32 to index
    %1 = memref.load %arg3[%0] : memref<8xi32, #tpu.memory_space<smem>>
    %c0_i32 = arith.constant 0 : i32
    %c0_i32_0 = arith.constant 0 : i32
    return %c0_i32, %1, %arg1, %arg2 : i32, i32, i32, i32
  }
  func.func @transform_1(%arg0: i32, %arg1: i32, %arg2: i32, %arg3: memref<8xi32, #tpu.memory_space<smem>>) -> (i32, i32, i32, i32) {
    %c0_i32 = arith.constant 0 : i32
    %c0_i32_0 = arith.constant 0 : i32
    return %c0_i32, %arg0, %arg1, %arg2 : i32, i32, i32, i32
  }
}

</mosaic_0001>

<llo_original>
// kernel: permute_channels_pallas.1
$region0: #{permute_channels_pallas.1}
  #allocation0 [shape = 'u32[]', space=smem, size = 0x4, offset = 0x4, fixed_abs, tag = 'smem constant byte address 0x4 - core index']
  #allocation1 [shape = 'u32[144,128]{1,0:T(1,128)}', space=vmem, size = 0x12000, scoped, tag = 'internal scratch']
  #allocation2 [shape = 's32[1]{0}', space=sflag, size = 0x4, scoped, tag = 'scoped memory for permute_channels_pallas.1']
  #allocation3 [shape = 'u8[512]{0}', space=smem, size = 0x200, scoped, tag = 'prefetched SMEM operand 0']
  %s0 = inlined_call_operand.vmem [shape: s32[8], index: 0, kind: input, shape index: {}]
  %s1 = inlined_call_operand.vmem [shape: f32[2,8,2,128], index: 1, kind: input, shape index: {}]
  %s2 = inlined_call_operand.vmem [shape: f32[2,8,2,128], index: 2, kind: output, shape index: {}]
  %s3 = sld [smem:[#allocation0]]
  $region101: #{permute_channels_pallas.1} parent=0
    _
  %s5 = ssub.s32 1, %s3
  %s6 = scalar_select 0, %s5, %s3
  %s7 = sshll.u32 %s0, 4
  %s8 = int_to_ptr.vmem [resolvable:$true] %s7
  %10 = dma.vmem_to_smem %s8, 16, [#allocation3], [#allocation2]
  %11 = dma.done [#allocation2], 16
  %12 = sfence
  $region1: #{permute_channels_pallas.1} parent=0
    #allocation4 [shape = 'u8[4096]{0}', space=vmem, size = 0x1000, scoped, tag = 'input window, operand 1']
    #allocation5 [shape = 'u8[4096]{0}', space=vmem, size = 0x1000, scoped, tag = 'output window, operand 0']
    loop: start=0, step=1, limit=10
    $region2: #{permute_channels_pallas.1} parent=1 // loop_pre_header
      _
    $region3: #{permute_channels_pallas.1} parent=1 // loop_header
      %s14 = sphi 0, %s18
      %p15 = scmp.ge.s32.totalorder %s14, 10
      %s21 = sphi 0, %s40
      %s22 = sphi 0, %s36
      %s23 = sphi 0, %s32
      %s24 = sphi 0, %s21
      %s25 = sphi 0, %s22
      %s26 = sphi 0, %s23
      %s27 = sphi 0, %s24
      %s28 = sphi 0, %s25
      %s29 = sphi 0, %s26
      %s49 = sphi 0, %s51
      %s52 = sphi 0, %s49
      %s53 = sphi 0, %s52
      %s69 = sphi 0, %s53
      %s79 = sphi 0, %s81
      %s82 = sphi 0, %s79
      %s83 = sphi 0, %s82
      %s99 = sphi 0, %s83
    $region4: #{permute_channels_pallas.1} parent=1 // loop_header_branch
      %17 = sbr.rel (%p15) target = $region8
    $region5: #{permute_channels_pallas.1} parent=1 // loop_body
      %s19 = ssub.s32 %s14, 1
      %s20 = ssub.s32 %s14, 2
      %s30 = sadd.s32 1, %s23
      %p31 = scmp.ge.s32.totalorder %s30, 1
      %s32 = scalar_select %p31, 0, %s30
      %s33 = sadd.s32 1, %s22
      %s34 = scalar_select %p31, %s33, %s22
      %p35 = scmp.ge.s32.totalorder %s34, 1
      %s36 = scalar_select %p35, 0, %s34
      %s37 = sadd.s32 1, %s21
      %s38 = scalar_select %p35, %s37, %s21
      %p39 = scmp.ge.s32.totalorder %s38, 8
      %s40 = scalar_select %p39, 0, %s38
      %s41 = sld [smem:[#allocation3 + %s21]]
      %s42 = sld [smem:[#allocation3 + %s40]]
      %s43 = ssub.s32 %s41, %s42
      %s44 = ssub.s32 %s22, %s36
      %s45 = sor.u32 %s43, %s44
      %s46 = ssub.s32 %s23, %s32
      %s47 = sor.u32 %s45, %s46
      %p48 = scmp.eq.s32.totalorder %s47, 0
      %s50 = sadd.s32 %s49, 1
      %s51 = scalar_select %p48, %s49, %s50
      %p54 = pneg %p48
      %p55 = scmp.eq.s32.totalorder %s14, 7
      %p56 = por %p54, %p55
      %p57 = scmp.ne.s32.totalorder %s49, %s52
      %p58 = scmp.eq.s32.totalorder %s14, 0
      %p59 = por %p57, %p58
      %p60 = scmp.ne.s32.totalorder %s49, %s52
      %p61 = scmp.eq.s32.totalorder %s19, 7
      %p62 = por %p60, %p61
      %p63 = scmp.ne.s32.totalorder %s52, %s53
      %p64 = scmp.eq.s32.totalorder %s19, 0
      %p65 = por %p63, %p64
      %p66 = scmp.ne.s32.totalorder %s52, %s53
      %p67 = scmp.eq.s32.totalorder %s20, 7
      %p68 = por %p66, %p67
      %p70 = scmp.ne.s32.totalorder %s53, %s69
      %p71 = scmp.eq.s32.totalorder %s20, 0
      %p72 = por %p70, %p71
      %s73 = ssub.s32 %s21, %s40
      %s74 = ssub.s32 %s22, %s36
      %s75 = sor.u32 %s73, %s74
      %s76 = ssub.s32 %s23, %s32
      %s77 = sor.u32 %s75, %s76
      %p78 = scmp.eq.s32.totalorder %s77, 0
      %s80 = sadd.s32 %s79, 1
      %s81 = scalar_select %p78, %s79, %s80
      %p84 = pneg %p78
      %p85 = scmp.eq.s32.totalorder %s14, 7
      %p86 = por %p84, %p85
      %p87 = scmp.ne.s32.totalorder %s79, %s82
      %p88 = scmp.eq.s32.totalorder %s14, 0
      %p89 = por %p87, %p88
      %p90 = scmp.ne.s32.totalorder %s79, %s82
      %p91 = scmp.eq.s32.totalorder %s19, 7
      %p92 = por %p90, %p91
      %p93 = scmp.ne.s32.totalorder %s82, %s83
      %p94 = scmp.eq.s32.totalorder %s19, 0
      %p95 = por %p93, %p94
      %p96 = scmp.ne.s32.totalorder %s82, %s83
      %p97 = scmp.eq.s32.totalorder %s20, 7
      %p98 = por %p96, %p97
      %p100 = scmp.ne.s32.totalorder %s83, %s99
      %p101 = scmp.eq.s32.totalorder %s20, 0
      %p102 = por %p100, %p101
      %p103 = scmp.le.s32.totalorder 1, %s14
      %p104 = scmp.lt.s32.totalorder %s14, 9
      %p105 = pnand %p103, %p104
      %p106 = pneg %p105
      // Predicated region
      $region9: #{permute_channels_pallas.1} parent=5 // pred_check
        _
      $region10: #{permute_channels_pallas.1} parent=5 // pred_check_branch
        %108 = sbr.rel (%p105) target = $region12
      $region11: #{permute_channels_pallas.1} parent=5 // pred_region
        %s109 = ssub.s32 %s14, 1
      $region12: #{permute_channels_pallas.1} parent=5 // pred_fallthru
        _
      %p110 = scmp.lt.s32.totalorder %s14, 8
      // Predicated region
      $region13: #{permute_channels_pallas.1} parent=5 // pred_check
        %p111 = pneg %p110
      $region14: #{permute_channels_pallas.1} parent=5 // pred_check_branch
        %113 = sbr.rel (%p111) target = $region16
      $region15: #{permute_channels_pallas.1} parent=5 // pred_region
        // Predicated region
        $region17: #{permute_channels_pallas.1} parent=15 // pred_check
          %p114 = pneg %p59
        $region18: #{permute_channels_pallas.1} parent=15 // pred_check_branch
          %116 = sbr.rel (%p114) target = $region20
        $region19: #{permute_channels_pallas.1} parent=15 // pred_region
          %s117 = sand.u32 %s49, 1
          %s118 = sand.u32 %s49, 1
          %s119 = smul.addr %s118, 4
          %s120 = scalar_lea.vmem [#allocation4], %s119
          %s121 = sld [smem:[#allocation3 + %s21]]
          %s122 = sadd.s32 %s23, %s22
          %s123 = sadd.s32 %s122, %s121
          %s124 = smul.addr %s123, 2
          %s125 = scalar_lea.vmem %s1, %s124
          // Predicated region
          $region21: #{permute_channels_pallas.1} parent=19 // pred_check
            _
          $region22: #{permute_channels_pallas.1} parent=19 // pred_check_branch
            %127 = sbr.rel (0) target = $region24
          $region23: #{permute_channels_pallas.1} parent=19 // pred_region
            // Predicated region
            $region25: #{permute_channels_pallas.1} parent=23 // pred_check
              _
            $region26: #{permute_channels_pallas.1} parent=23 // pred_check_branch
              %129 = sbr.rel target = $region28
            $region27: #{permute_channels_pallas.1} parent=23 // pred_region
              // Predicated region
              $region40: #{permute_channels_pallas.1} parent=27 // pred_check
                _
              $region41: #{permute_channels_pallas.1} parent=27 // pred_check_branch
                %146 = sbr.rel (0) target = $region43
              $region42: #{permute_channels_pallas.1} parent=27 // pred_region
                loop: start=0, step=1, limit=1
                $region44: #{permute_channels_pallas.1} parent=42 // loop_pre_header
                  _
                $region45: #{permute_channels_pallas.1} parent=42 // loop_header
                  %s149 = sphi 0, %s153
                  %p150 = scmp.ge.s32.totalorder %s149, 1
                  %s154 = sphi %s125, %s125
                  %s155 = sphi %s120, %s120
                $region46: #{permute_channels_pallas.1} parent=42 // loop_header_branch
                  %152 = sbr.rel (%p150) target = $region50
                $region47: #{permute_channels_pallas.1} parent=42 // loop_body
                  %v156 = vld [vmem:[%s154] sm:$0x3]
                  %157 = vst [vmem:[%s155] sm:$0x3] %v156
                  %v158 = vld [vmem:[%s154 + $0x10] sm:$0x3]
                  %159 = vst [vmem:[%s155 + $0x2] sm:$0x3] %v158
                $region48: #{permute_channels_pallas.1} parent=42 // loop_footer
                  %s153 = sadd.s32 1, %s149
                $region49: #{permute_channels_pallas.1} parent=42 // loop_footer_branch
                  %148 = sbr.rel target = $region45
                $region50: #{permute_channels_pallas.1} parent=42 // loop_exit
                  _
              $region43: #{permute_channels_pallas.1} parent=27 // pred_fallthru
                _
            $region28: #{permute_channels_pallas.1} parent=23 // pred_fallthru
              _
            // Predicated region
            $region29: #{permute_channels_pallas.1} parent=23 // pred_check
              _
            $region30: #{permute_channels_pallas.1} parent=23 // pred_check_branch
              %131 = sbr.rel (0) target = $region32
            $region31: #{permute_channels_pallas.1} parent=23 // pred_region
              loop: start=0, step=1, limit=1
              $region33: #{permute_channels_pallas.1} parent=31 // loop_pre_header
                _
              $region34: #{permute_channels_pallas.1} parent=31 // loop_header
                %s134 = sphi 0, %s138
                %p135 = scmp.ge.s32.totalorder %s134, 1
                %s139 = sphi %s125, %s125
                %s140 = sphi %s120, %s120
              $region35: #{permute_channels_pallas.1} parent=31 // loop_header_branch
                %137 = sbr.rel (%p135) target = $region39
              $region36: #{permute_channels_pallas.1} parent=31 // loop_body
                %v141 = vld [vmem:[%s139] sm:$0x3]
                %142 = vst [vmem:[%s140] sm:$0x3] %v141
                %v143 = vld [vmem:[%s139 + $0x10] sm:$0x3]
                %144 = vst [vmem:[%s140 + $0x2] sm:$0x3] %v143
              $region37: #{permute_channels_pallas.1} parent=31 // loop_footer
                %s138 = sadd.s32 1, %s134
              $region38: #{permute_channels_pallas.1} parent=31 // loop_footer_branch
                %133 = sbr.rel target = $region34
              $region39: #{permute_channels_pallas.1} parent=31 // loop_exit
                _
            $region32: #{permute_channels_pallas.1} parent=23 // pred_fallthru
              _
          $region24: #{permute_channels_pallas.1} parent=19 // pred_fallthru
            _
          %160 = vnop
        $region20: #{permute_channels_pallas.1} parent=15 // pred_fallthru
          _
      $region16: #{permute_channels_pallas.1} parent=5 // pred_fallthru
        _
      %p161 = scmp.le.s32.totalorder 1, %s14
      %p162 = scmp.lt.s32.totalorder %s14, 9
      %p163 = pnand %p161, %p162
      %p164 = pneg %p163
      // Predicated region
      $region51: #{permute_channels_pallas.1} parent=5 // pred_check
        _
      $region52: #{permute_channels_pallas.1} parent=5 // pred_check_branch
        %166 = sbr.rel (%p163) target = $region54
      $region53: #{permute_channels_pallas.1} parent=5 // pred_region
        %s167 = ssub.s32 %s14, 1
        %s168 = sand.u32 %s52, 1
        %s169 = sand.u32 %s52, 1
        %s170 = smul.addr %s169, 4
        %s171 = scalar_lea.vmem [#allocation4], %s170
        // Predicated region
        $region55: #{permute_channels_pallas.1} parent=53 // pred_check
          %p172 = pneg %p65
        $region56: #{permute_channels_pallas.1} parent=53 // pred_check_branch
          %174 = sbr.rel (%p172) target = $region58
        $region57: #{permute_channels_pallas.1} parent=53 // pred_region
          _
        $region58: #{permute_channels_pallas.1} parent=53 // pred_fallthru
          _
        %s175 = sand.u32 %s52, 1
        %s176 = sand.u32 %s52, 1
        %s177 = smul.addr %s176, 4
        %s178 = scalar_lea.vmem [#allocation4], %s177
        %p179 = pneg %p65
        %p180 = pneg %p62
        %p181 = pneg %p95
        %p182 = pneg %p92
        %s183 = sand.u32 %s82, 1
        %s184 = sand.u32 %s82, 1
        %s185 = smul.addr %s184, 4
        %s186 = scalar_lea.vmem [#allocation5], %s185
        %s187 = sld [smem:[#allocation3 + %s24]]
        %v188 = vld [vmem:[%s171] sm:$0x3]
        %v189 = vld [vmem:[%s171 + $0x2] sm:$0x3]
        %190 = vst [vmem:[%s186] sm:$0x3] %v188
        %191 = vst [vmem:[%s186 + $0x2] sm:$0x3] %v189
        %s192 = sand.u32 %s82, 1
        %s193 = sand.u32 %s82, 1
        %s194 = smul.addr %s193, 4
        %s195 = scalar_lea.vmem [#allocation5], %s194
        // Predicated region
        $region59: #{permute_channels_pallas.1} parent=53 // pred_check
          %p196 = pneg %p92
        $region60: #{permute_channels_pallas.1} parent=53 // pred_check_branch
          %198 = sbr.rel (%p196) target = $region62
        $region61: #{permute_channels_pallas.1} parent=53 // pred_region
          %s199 = sadd.s32 %s26, %s25
          %s200 = sadd.s32 %s199, %s24
          %s201 = smul.addr %s200, 2
          %s202 = scalar_lea.vmem %s2, %s201
          // Predicated region
          $region63: #{permute_channels_pallas.1} parent=61 // pred_check
            _
          $region64: #{permute_channels_pallas.1} parent=61 // pred_check_branch
            %204 = sbr.rel (0) target = $region66
          $region65: #{permute_channels_pallas.1} parent=61 // pred_region
            // Predicated region
            $region67: #{permute_channels_pallas.1} parent=65 // pred_check
              _
            $region68: #{permute_channels_pallas.1} parent=65 // pred_check_branch
              %206 = sbr.rel target = $region70
            $region69: #{permute_channels_pallas.1} parent=65 // pred_region
              // Predicated region
              $region82: #{permute_channels_pallas.1} parent=69 // pred_check
                _
              $region83: #{permute_channels_pallas.1} parent=69 // pred_check_branch
                %223 = sbr.rel (0) target = $region85
              $region84: #{permute_channels_pallas.1} parent=69 // pred_region
                loop: start=0, step=1, limit=1
                $region86: #{permute_channels_pallas.1} parent=84 // loop_pre_header
                  _
                $region87: #{permute_channels_pallas.1} parent=84 // loop_header
                  %s226 = sphi 0, %s230
                  %p227 = scmp.ge.s32.totalorder %s226, 1
                  %s231 = sphi %s195, %s195
                  %s232 = sphi %s202, %s202
                $region88: #{permute_channels_pallas.1} parent=84 // loop_header_branch
                  %229 = sbr.rel (%p227) target = $region92
                $region89: #{permute_channels_pallas.1} parent=84 // loop_body
                  %v233 = vld [vmem:[%s231] sm:$0x3]
                  %234 = vst [vmem:[%s232] sm:$0x3] %v233
                  %v235 = vld [vmem:[%s231 + $0x2] sm:$0x3]
                  %236 = vst [vmem:[%s232 + $0x10] sm:$0x3] %v235
                $region90: #{permute_channels_pallas.1} parent=84 // loop_footer
                  %s230 = sadd.s32 1, %s226
                $region91: #{permute_channels_pallas.1} parent=84 // loop_footer_branch
                  %225 = sbr.rel target = $region87
                $region92: #{permute_channels_pallas.1} parent=84 // loop_exit
                  _
              $region85: #{permute_channels_pallas.1} parent=69 // pred_fallthru
                _
            $region70: #{permute_channels_pallas.1} parent=65 // pred_fallthru
              _
            // Predicated region
            $region71: #{permute_channels_pallas.1} parent=65 // pred_check
              _
            $region72: #{permute_channels_pallas.1} parent=65 // pred_check_branch
              %208 = sbr.rel (0) target = $region74
            $region73: #{permute_channels_pallas.1} parent=65 // pred_region
              loop: start=0, step=1, limit=1
              $region75: #{permute_channels_pallas.1} parent=73 // loop_pre_header
                _
              $region76: #{permute_channels_pallas.1} parent=73 // loop_header
                %s211 = sphi 0, %s215
                %p212 = scmp.ge.s32.totalorder %s211, 1
                %s216 = sphi %s195, %s195
                %s217 = sphi %s202, %s202
              $region77: #{permute_channels_pallas.1} parent=73 // loop_header_branch
                %214 = sbr.rel (%p212) target = $region81
              $region78: #{permute_channels_pallas.1} parent=73 // loop_body
                %v218 = vld [vmem:[%s216] sm:$0x3]
                %219 = vst [vmem:[%s217] sm:$0x3] %v218
                %v220 = vld [vmem:[%s216 + $0x2] sm:$0x3]
                %221 = vst [vmem:[%s217 + $0x10] sm:$0x3] %v220
              $region79: #{permute_channels_pallas.1} parent=73 // loop_footer
                %s215 = sadd.s32 1, %s211
              $region80: #{permute_channels_pallas.1} parent=73 // loop_footer_branch
                %210 = sbr.rel target = $region76
              $region81: #{permute_channels_pallas.1} parent=73 // loop_exit
                _
            $region74: #{permute_channels_pallas.1} parent=65 // pred_fallthru
              _
          $region66: #{permute_channels_pallas.1} parent=61 // pred_fallthru
            _
          %237 = vnop
        $region62: #{permute_channels_pallas.1} parent=53 // pred_fallthru
          _
      $region54: #{permute_channels_pallas.1} parent=5 // pred_fallthru
        _
      %p238 = scmp.le.s32.totalorder 2, %s14
      // Predicated region
      $region93: #{permute_channels_pallas.1} parent=5 // pred_check
        %p239 = pneg %p238
      $region94: #{permute_channels_pallas.1} parent=5 // pred_check_branch
        %241 = sbr.rel (%p239) target = $region96
      $region95: #{permute_channels_pallas.1} parent=5 // pred_region
        %s242 = ssub.s32 %s14, 2
        // Predicated region
        $region97: #{permute_channels_pallas.1} parent=95 // pred_check
          %p243 = pneg %p98
        $region98: #{permute_channels_pallas.1} parent=95 // pred_check_branch
          %245 = sbr.rel (%p243) target = $region100
        $region99: #{permute_channels_pallas.1} parent=95 // pred_region
          %s246 = sand.u32 %s83, 1
          %s247 = sand.u32 %s83, 1
          %s248 = smul.addr %s247, 4
          %s249 = scalar_lea.vmem [#allocation5], %s248
        $region100: #{permute_channels_pallas.1} parent=95 // pred_fallthru
          _
      $region96: #{permute_channels_pallas.1} parent=5 // pred_fallthru
        _
    $region6: #{permute_channels_pallas.1} parent=1 // loop_footer
      %s18 = sadd.s32 1, %s14
    $region7: #{permute_channels_pallas.1} parent=1 // loop_footer_branch
      %13 = sbr.rel target = $region3
    $region8: #{permute_channels_pallas.1} parent=1 // loop_exit
      _

</llo_original>
